<compile_context>
chip_gen: v6e
topology: v6e:2x2x1
jax: 0.10.0
libtpu: 0.0.40
codegen_flags: <defaults>
</compile_context>

<pallas_src>
import jax
import jax.numpy as jnp
from jax import lax
from jax.experimental import pallas as pl
from jax.experimental.pallas import tpu as pltpu


def dwconv_kernel(x_ref, top_ref, bot_ref, w_ref, b_ref, o_ref):
    """Computes one (TH, W, C) output row band of a 3x3 depthwise conv.

    x_ref:   (TH, W, C) unpadded rows of this band
    top_ref: (1, W, C)  row just above the band (index clamped; masked at t==0)
    bot_ref: (1, W, C)  row just below the band (index clamped; masked at last t)
    w_ref:   (9, C)     depthwise taps, row index = ky*3 + kx
    b_ref:   (1, C)     per-channel bias
    o_ref:   (TH, W, C)
    """
    t = pl.program_id(1)
    nt = pl.num_programs(1)
    TH, W, C = o_ref.shape
    f32 = jnp.float32

    # Cast once per band (not per tap).
    xc = x_ref[...].astype(f32)                        # (TH, W, C)
    top = top_ref[...].astype(f32)                     # (1, W, C)
    bot = bot_ref[...].astype(f32)                     # (1, W, C)

    # Zero the halo rows at the image border (their DMA index was clamped).
    top = jnp.where(t == 0, jnp.zeros_like(top), top)
    bot = jnp.where(t == nt - 1, jnp.zeros_like(bot), bot)

    # Rows (r0-1 .. r0+TH) of the virtually zero-padded image.  Axis 0 is not
    # a lane/sublane axis, so this concat and the slices below are cheap.
    x_ext = jnp.concatenate([top, xc, bot], axis=0)    # (TH+2, W, C)

    w = w_ref[...].astype(f32)                         # (9, C), read/cast once

    def col_sum(kx):
        # sum over ky of w[ky, kx] * x[row + ky - 1]  (cheap row-offset slices)
        return (x_ext[0:TH] * w[0 * 3 + kx]
                + x_ext[1:TH + 1] * w[1 * 3 + kx]
                + x_ext[2:TH + 2] * w[2 * 3 + kx])

    # Accumulator starts from the bias: no separate full-band bias pass.
    acc = col_sum(1) + b_ref[0, :].astype(f32)         # kx = 1: no column shift

    # Only two W-direction shifts per band; the image's left/right zero pad is
    # synthesized with an explicit zero column (wraparound-safe by design).
    zcol = jnp.zeros((TH, 1, C), f32)
    a_left = col_sum(0)                                # needs x column c-1
    acc = acc + jnp.concatenate([zcol, a_left[:, :W - 1, :]], axis=1)
    a_right = col_sum(2)                               # needs x column c+1
    acc = acc + jnp.concatenate([a_right[:, 1:, :], zcol], axis=1)

    o_ref[...] = acc.astype(o_ref.dtype)


def _pick_row_tile(H):
    """Row-band height: ~8 rows (register-friendly f32 accumulator) that
    divides H and yields >= 2 bands (megacore); otherwise fall back to H."""
    for th in (8, 16, 4, 2):
        if H % th == 0 and H // th >= 2:
            return th
    return H


def dwconv_pallas(x, weight, bias, H, W):
    """x: (B, N, C) with N == H*W. weight: (C, 1, 3, 3) torch layout, bias: (C,)."""
    B, N, C = x.shape
    assert N == H * W

    # Glue: (B, N, C) -> (B, H, W, C).  NOTE: no zero-pad copy of x.
    x_nhwc = x.reshape(B, H, W, C)

    # Depthwise taps: (C, 1, 3, 3) -> (3, 3, C) -> (9, C); bias -> (1, C).
    w_taps = jnp.transpose(weight[:, 0, :, :], (1, 2, 0)).reshape(9, C)
    b_row = bias.reshape(1, C)

    TH = _pick_row_tile(H)
    nt = H // TH

    grid_spec = pltpu.PrefetchScalarGridSpec(
        num_scalar_prefetch=0,
        grid=(B, nt),
        in_specs=[
            # Current band (TH rows, no halo).
            pl.BlockSpec((pl.Squeezed(), TH, W, C),
                         lambda b, t: (b, t, 0, 0)),
            # Row just above the band (1-row blocks -> block index == row
            # index), clamped at the top border; masked in-kernel when t == 0.
            pl.BlockSpec((pl.Squeezed(), 1, W, C),
                         lambda b, t: (b, jnp.maximum(t * TH - 1, 0), 0, 0)),
            # Row just below the band, clamped at the bottom border; masked
            # in-kernel when t == nt - 1.
            pl.BlockSpec((pl.Squeezed(), 1, W, C),
                         lambda b, t: (b, jnp.minimum((t + 1) * TH, H - 1), 0, 0)),
            # Taps and bias: constant block index -> DMA'd once.
            pl.BlockSpec((9, C), lambda b, t: (0, 0)),
            pl.BlockSpec((1, C), lambda b, t: (0, 0)),
        ],
        out_specs=pl.BlockSpec((pl.Squeezed(), TH, W, C),
                               lambda b, t: (b, t, 0, 0)),
    )

    out_nhwc = pl.pallas_call(
        dwconv_kernel,
        out_shape=jax.ShapeDtypeStruct((B, H, W, C), x.dtype),
        grid_spec=grid_spec,
        compiler_params=pltpu.CompilerParams(
            dimension_semantics=("parallel", "parallel"),
            vmem_limit_bytes=32 * 1024 * 1024,
        ),
    )(x_nhwc, x_nhwc, x_nhwc, w_taps, b_row)

    # Glue: (B, H, W, C) -> (B, N, C)  (matches torch .flatten(2).transpose(1,2)).
    return out_nhwc.reshape(B, N, C)


def dwconv_reference(x, weight, bias, H, W):
    """Pure-JAX reference mirroring the PyTorch NCHW depthwise conv."""
    B, N, C = x.shape
    x_nchw = jnp.transpose(x, (0, 2, 1)).reshape(B, C, H, W)
    out = lax.conv_general_dilated(
        x_nchw, weight,
        window_strides=(1, 1), padding=((1, 1), (1, 1)),
        dimension_numbers=("NCHW", "OIHW", "NCHW"),
        feature_group_count=C)
    out = out + bias.reshape(1, C, 1, 1)
    return jnp.transpose(out.reshape(B, C, H * W), (0, 2, 1))


if __name__ == "__main__":
    # Small PVTv2-like shapes; C = 128 keeps the output lane-dense.
    B, H, W, C = 2, 16, 16, 128
    N = H * W

    key = jax.random.PRNGKey(0)
    kx, kw, kb = jax.random.split(key, 3)

    x = jax.random.normal(kx, (B, N, C), dtype=jnp.float32)
    # nn.Conv2d(dim, dim, 3, groups=dim) -> weight (dim, 1, 3, 3), bias (dim,)
    fan_in = 1 * 3 * 3
    bound = 1.0 / (fan_in ** 0.5)
    weight = jax.random.uniform(kw, (C, 1, 3, 3), jnp.float32, -bound, bound)
    bias = jax.random.uniform(kb, (C,), jnp.float32, -bound, bound)

    out = dwconv_pallas(x, weight, bias, H, W)
    out = jax.block_until_ready(out)

    ref = dwconv_reference(x, weight, bias, H, W)
    assert out.shape == (B, N, C)
    assert jnp.allclose(out, ref, atol=1e-4, rtol=1e-4), "mismatch vs reference"

    print("KERNEL_OK")
</pallas_src>

<mosaic_0001>
module attributes {stable_mosaic.version = 11 : i64} {
  func.func @dwconv_kernel(%arg0: i32, %arg1: i32, %arg2: memref<1x8x16x128xf32, #tpu.memory_space<vmem>>, %arg3: memref<1x1x16x128xf32, #tpu.memory_space<vmem>>, %arg4: memref<1x1x16x128xf32, #tpu.memory_space<vmem>>, %arg5: memref<9x128xf32, #tpu.memory_space<vmem>>, %arg6: memref<1x128xf32, #tpu.memory_space<vmem>>, %arg7: memref<1x8x16x128xf32, #tpu.memory_space<vmem>>) attributes {dimension_semantics = [#tpu.dimension_semantics<parallel>, #tpu.dimension_semantics<parallel>], iteration_bounds = array<i64: 2, 2>, scalar_prefetch = 0 : i64, scratch_operands = 0 : i64, tpu.core_type = #tpu.core_type<tc>, window_params = [{transform_indices = @transform_0, window_bounds = array<i64: 1, 8, 16, 128>}, {transform_indices = @transform_1, window_bounds = array<i64: 1, 1, 16, 128>}, {transform_indices = @transform_2, window_bounds = array<i64: 1, 1, 16, 128>}, {pipeline_mode = #tpu.pipeline_mode<synchronous>, transform_indices = @transform_3, window_bounds = array<i64: 9, 128>}, {pipeline_mode = #tpu.pipeline_mode<synchronous>, transform_indices = @transform_4, window_bounds = array<i64: 1, 128>}, {transform_indices = @transform_5, window_bounds = array<i64: 1, 8, 16, 128>}]} {
    %c0 = arith.constant 0 : index
    %c0_0 = arith.constant 0 : index
    %c0_1 = arith.constant 0 : index
    %c0_2 = arith.constant 0 : index
    %0 = vector.load %arg2[%c0, %c0_0, %c0_1, %c0_2] : memref<1x8x16x128xf32, #tpu.memory_space<vmem>>, vector<1x8x16x128xf32>
    %1 = vector.shape_cast %0 : vector<1x8x16x128xf32> to vector<8x16x128xf32>
    %c0_3 = arith.constant 0 : index
    %c0_4 = arith.constant 0 : index
    %c0_5 = arith.constant 0 : index
    %c0_6 = arith.constant 0 : index
    %2 = vector.load %arg3[%c0_3, %c0_4, %c0_5, %c0_6] : memref<1x1x16x128xf32, #tpu.memory_space<vmem>>, vector<1x1x16x128xf32>
    %3 = vector.shape_cast %2 : vector<1x1x16x128xf32> to vector<1x16x128xf32>
    %c0_7 = arith.constant 0 : index
    %c0_8 = arith.constant 0 : index
    %c0_9 = arith.constant 0 : index
    %c0_10 = arith.constant 0 : index
    %4 = vector.load %arg4[%c0_7, %c0_8, %c0_9, %c0_10] : memref<1x1x16x128xf32, #tpu.memory_space<vmem>>, vector<1x1x16x128xf32>
    %5 = vector.shape_cast %4 : vector<1x1x16x128xf32> to vector<1x16x128xf32>
    %c0_i32 = arith.constant 0 : i32
    %6 = arith.cmpi eq, %arg1, %c0_i32 : i32
    %cst = arith.constant 0.000000e+00 : f32
    %7 = vector.broadcast %cst : f32 to vector<1x16x128xf32>
    %8 = arith.select %6, %7, %3 : vector<1x16x128xf32>
    %c1_i32 = arith.constant 1 : i32
    %9 = arith.cmpi eq, %arg1, %c1_i32 : i32
    %cst_11 = arith.constant 0.000000e+00 : f32
    %10 = vector.broadcast %cst_11 : f32 to vector<1x16x128xf32>
    %11 = arith.select %9, %10, %5 : vector<1x16x128xf32>
    %12 = tpu.concatenate %8, %1, %11 in 0 : vector<1x16x128xf32>, vector<8x16x128xf32>, vector<1x16x128xf32> -> vector<10x16x128xf32>
    %c0_12 = arith.constant 0 : index
    %c0_13 = arith.constant 0 : index
    %13 = vector.load %arg5[%c0_12, %c0_13] : memref<9x128xf32, #tpu.memory_space<vmem>>, vector<9x128xf32>
    %14 = vector.extract_strided_slice %12 {offsets = [0, 0, 0], sizes = [8, 16, 128], strides = [1, 1, 1]} : vector<10x16x128xf32> to vector<8x16x128xf32>
    %15 = vector.extract_strided_slice %13 {offsets = [1, 0], sizes = [1, 128], strides = [1, 1]} : vector<9x128xf32> to vector<1x128xf32>
    %16 = vector.shape_cast %15 : vector<1x128xf32> to vector<128xf32>
    %17 = vector.shape_cast %16 : vector<128xf32> to vector<1x1x128xf32>
    %18 = vector.broadcast %17 : vector<1x1x128xf32> to vector<8x16x128xf32>
    %19 = arith.mulf %14, %18 : vector<8x16x128xf32>
    %20 = vector.extract_strided_slice %12 {offsets = [1, 0, 0], sizes = [8, 16, 128], strides = [1, 1, 1]} : vector<10x16x128xf32> to vector<8x16x128xf32>
    %21 = vector.extract_strided_slice %13 {offsets = [4, 0], sizes = [1, 128], strides = [1, 1]} : vector<9x128xf32> to vector<1x128xf32>
    %22 = vector.shape_cast %21 : vector<1x128xf32> to vector<128xf32>
    %23 = vector.shape_cast %22 : vector<128xf32> to vector<1x1x128xf32>
    %24 = vector.broadcast %23 : vector<1x1x128xf32> to vector<8x16x128xf32>
    %25 = arith.mulf %20, %24 : vector<8x16x128xf32>
    %26 = arith.addf %19, %25 : vector<8x16x128xf32>
    %27 = vector.extract_strided_slice %12 {offsets = [2, 0, 0], sizes = [8, 16, 128], strides = [1, 1, 1]} : vector<10x16x128xf32> to vector<8x16x128xf32>
    %28 = vector.extract_strided_slice %13 {offsets = [7, 0], sizes = [1, 128], strides = [1, 1]} : vector<9x128xf32> to vector<1x128xf32>
    %29 = vector.shape_cast %28 : vector<1x128xf32> to vector<128xf32>
    %30 = vector.shape_cast %29 : vector<128xf32> to vector<1x1x128xf32>
    %31 = vector.broadcast %30 : vector<1x1x128xf32> to vector<8x16x128xf32>
    %32 = arith.mulf %27, %31 : vector<8x16x128xf32>
    %33 = arith.addf %26, %32 : vector<8x16x128xf32>
    %c0_14 = arith.constant 0 : index
    %c0_15 = arith.constant 0 : index
    %34 = vector.load %arg6[%c0_14, %c0_15] : memref<1x128xf32, #tpu.memory_space<vmem>>, vector<1x128xf32>
    %35 = vector.shape_cast %34 : vector<1x128xf32> to vector<128xf32>
    %36 = vector.shape_cast %35 : vector<128xf32> to vector<1x1x128xf32>
    %37 = vector.broadcast %36 : vector<1x1x128xf32> to vector<8x16x128xf32>
    %38 = arith.addf %33, %37 : vector<8x16x128xf32>
    %cst_16 = arith.constant 0.000000e+00 : f32
    %39 = vector.broadcast %cst_16 : f32 to vector<8x1x128xf32>
    %40 = vector.extract_strided_slice %12 {offsets = [0, 0, 0], sizes = [8, 16, 128], strides = [1, 1, 1]} : vector<10x16x128xf32> to vector<8x16x128xf32>
    %41 = vector.extract_strided_slice %13 {offsets = [0, 0], sizes = [1, 128], strides = [1, 1]} : vector<9x128xf32> to vector<1x128xf32>
    %42 = vector.shape_cast %41 : vector<1x128xf32> to vector<128xf32>
    %43 = vector.shape_cast %42 : vector<128xf32> to vector<1x1x128xf32>
    %44 = vector.broadcast %43 : vector<1x1x128xf32> to vector<8x16x128xf32>
    %45 = arith.mulf %40, %44 : vector<8x16x128xf32>
    %46 = vector.extract_strided_slice %12 {offsets = [1, 0, 0], sizes = [8, 16, 128], strides = [1, 1, 1]} : vector<10x16x128xf32> to vector<8x16x128xf32>
    %47 = vector.extract_strided_slice %13 {offsets = [3, 0], sizes = [1, 128], strides = [1, 1]} : vector<9x128xf32> to vector<1x128xf32>
    %48 = vector.shape_cast %47 : vector<1x128xf32> to vector<128xf32>
    %49 = vector.shape_cast %48 : vector<128xf32> to vector<1x1x128xf32>
    %50 = vector.broadcast %49 : vector<1x1x128xf32> to vector<8x16x128xf32>
    %51 = arith.mulf %46, %50 : vector<8x16x128xf32>
    %52 = arith.addf %45, %51 : vector<8x16x128xf32>
    %53 = vector.extract_strided_slice %12 {offsets = [2, 0, 0], sizes = [8, 16, 128], strides = [1, 1, 1]} : vector<10x16x128xf32> to vector<8x16x128xf32>
    %54 = vector.extract_strided_slice %13 {offsets = [6, 0], sizes = [1, 128], strides = [1, 1]} : vector<9x128xf32> to vector<1x128xf32>
    %55 = vector.shape_cast %54 : vector<1x128xf32> to vector<128xf32>
    %56 = vector.shape_cast %55 : vector<128xf32> to vector<1x1x128xf32>
    %57 = vector.broadcast %56 : vector<1x1x128xf32> to vector<8x16x128xf32>
    %58 = arith.mulf %53, %57 : vector<8x16x128xf32>
    %59 = arith.addf %52, %58 : vector<8x16x128xf32>
    %60 = vector.extract_strided_slice %59 {offsets = [0, 0, 0], sizes = [8, 15, 128], strides = [1, 1, 1]} : vector<8x16x128xf32> to vector<8x15x128xf32>
    %61 = tpu.concatenate %39, %60 in 1 : vector<8x1x128xf32>, vector<8x15x128xf32> -> vector<8x16x128xf32>
    %62 = arith.addf %38, %61 : vector<8x16x128xf32>
    %63 = vector.extract_strided_slice %12 {offsets = [0, 0, 0], sizes = [8, 16, 128], strides = [1, 1, 1]} : vector<10x16x128xf32> to vector<8x16x128xf32>
    %64 = vector.extract_strided_slice %13 {offsets = [2, 0], sizes = [1, 128], strides = [1, 1]} : vector<9x128xf32> to vector<1x128xf32>
    %65 = vector.shape_cast %64 : vector<1x128xf32> to vector<128xf32>
    %66 = vector.shape_cast %65 : vector<128xf32> to vector<1x1x128xf32>
    %67 = vector.broadcast %66 : vector<1x1x128xf32> to vector<8x16x128xf32>
    %68 = arith.mulf %63, %67 : vector<8x16x128xf32>
    %69 = vector.extract_strided_slice %12 {offsets = [1, 0, 0], sizes = [8, 16, 128], strides = [1, 1, 1]} : vector<10x16x128xf32> to vector<8x16x128xf32>
    %70 = vector.extract_strided_slice %13 {offsets = [5, 0], sizes = [1, 128], strides = [1, 1]} : vector<9x128xf32> to vector<1x128xf32>
    %71 = vector.shape_cast %70 : vector<1x128xf32> to vector<128xf32>
    %72 = vector.shape_cast %71 : vector<128xf32> to vector<1x1x128xf32>
    %73 = vector.broadcast %72 : vector<1x1x128xf32> to vector<8x16x128xf32>
    %74 = arith.mulf %69, %73 : vector<8x16x128xf32>
    %75 = arith.addf %68, %74 : vector<8x16x128xf32>
    %76 = vector.extract_strided_slice %12 {offsets = [2, 0, 0], sizes = [8, 16, 128], strides = [1, 1, 1]} : vector<10x16x128xf32> to vector<8x16x128xf32>
    %77 = vector.extract_strided_slice %13 {offsets = [8, 0], sizes = [1, 128], strides = [1, 1]} : vector<9x128xf32> to vector<1x128xf32>
    %78 = vector.shape_cast %77 : vector<1x128xf32> to vector<128xf32>
    %79 = vector.shape_cast %78 : vector<128xf32> to vector<1x1x128xf32>
    %80 = vector.broadcast %79 : vector<1x1x128xf32> to vector<8x16x128xf32>
    %81 = arith.mulf %76, %80 : vector<8x16x128xf32>
    %82 = arith.addf %75, %81 : vector<8x16x128xf32>
    %83 = vector.extract_strided_slice %82 {offsets = [0, 1, 0], sizes = [8, 15, 128], strides = [1, 1, 1]} : vector<8x16x128xf32> to vector<8x15x128xf32>
    %84 = tpu.concatenate %83, %39 in 1 : vector<8x15x128xf32>, vector<8x1x128xf32> -> vector<8x16x128xf32>
    %85 = arith.addf %62, %84 : vector<8x16x128xf32>
    %c0_17 = arith.constant 0 : index
    %c0_18 = arith.constant 0 : index
    %c0_19 = arith.constant 0 : index
    %c0_20 = arith.constant 0 : index
    %86 = vector.load %arg7[%c0_17, %c0_18, %c0_19, %c0_20] : memref<1x8x16x128xf32, #tpu.memory_space<vmem>>, vector<1x8x16x128xf32>
    %87 = vector.shape_cast %86 : vector<1x8x16x128xf32> to vector<8x16x128xf32>
    %88 = vector.shape_cast %85 : vector<8x16x128xf32> to vector<1x8x16x128xf32>
    tpu.vector_store %arg7[%c0_17, %c0_18, %c0_19, %c0_20], %88 {strides = array<i32>} : memref<1x8x16x128xf32, #tpu.memory_space<vmem>>, vector<1x8x16x128xf32>,
    return
  }
  func.func @transform_0(%arg0: i32, %arg1: i32) -> (i32, i32, i32, i32) {
    %c0_i32 = arith.constant 0 : i32
    %c0_i32_0 = arith.constant 0 : i32
    %c0_i32_1 = arith.constant 0 : i32
    return %arg0, %arg1, %c0_i32, %c0_i32_0 : i32, i32, i32, i32
  }
  func.func @transform_1(%arg0: i32, %arg1: i32) -> (i32, i32, i32, i32) {
    %c8_i32 = arith.constant 8 : i32
    %0 = arith.muli %arg1, %c8_i32 : i32
    %c1_i32 = arith.constant 1 : i32
    %1 = arith.subi %0, %c1_i32 : i32
    %c0_i32 = arith.constant 0 : i32
    %2 = arith.maxsi %1, %c0_i32 : i32
    %c0_i32_0 = arith.constant 0 : i32
    %c0_i32_1 = arith.constant 0 : i32
    %c0_i32_2 = arith.constant 0 : i32
    return %arg0, %2, %c0_i32_0, %c0_i32_1 : i32, i32, i32, i32
  }
  func.func @transform_2(%arg0: i32, %arg1: i32) -> (i32, i32, i32, i32) {
    %c1_i32 = arith.constant 1 : i32
    %0 = arith.addi %arg1, %c1_i32 : i32
    %c8_i32 = arith.constant 8 : i32
    %1 = arith.muli %0, %c8_i32 : i32
    %c15_i32 = arith.constant 15 : i32
    %2 = arith.minsi %1, %c15_i32 : i32
    %c0_i32 = arith.constant 0 : i32
    %c0_i32_0 = arith.constant 0 : i32
    %c0_i32_1 = arith.constant 0 : i32
    return %arg0, %2, %c0_i32, %c0_i32_0 : i32, i32, i32, i32
  }
  func.func @transform_3(%arg0: i32, %arg1: i32) -> (i32, i32) {
    %c0_i32 = arith.constant 0 : i32
    %c0_i32_0 = arith.constant 0 : i32
    %c0_i32_1 = arith.constant 0 : i32
    return %c0_i32, %c0_i32_0 : i32, i32
  }
  func.func @transform_4(%arg0: i32, %arg1: i32) -> (i32, i32) {
    %c0_i32 = arith.constant 0 : i32
    %c0_i32_0 = arith.constant 0 : i32
    %c0_i32_1 = arith.constant 0 : i32
    return %c0_i32, %c0_i32_0 : i32, i32
  }
  func.func @transform_5(%arg0: i32, %arg1: i32) -> (i32, i32, i32, i32) {
    %c0_i32 = arith.constant 0 : i32
    %c0_i32_0 = arith.constant 0 : i32
    %c0_i32_1 = arith.constant 0 : i32
    return %arg0, %arg1, %c0_i32, %c0_i32_0 : i32, i32, i32, i32
  }
}

</mosaic_0001>

<llo_original>
// kernel: tpu_custom_call.1
$region0: #{tpu_custom_call.1}
  #allocation0 [shape = 'u32[]', space=smem, size = 0x4, offset = 0x4, fixed_abs, tag = 'smem constant byte address 0x4 - core index']
  #allocation1 [shape = 'u32[144,128]{1,0:T(1,128)}', space=vmem, size = 0x12000, scoped, tag = 'internal scratch']
  %s0 = inlined_call_operand.hbm [shape: f32[2,16,16,128], index: 0, kind: input, shape index: {}]
  %s1 = inlined_call_operand.hbm [shape: f32[2,16,16,128], index: 1, kind: input, shape index: {}]
  %s2 = inlined_call_operand.hbm [shape: f32[2,16,16,128], index: 2, kind: input, shape index: {}]
  %s3 = inlined_call_operand.hbm [shape: f32[9,128], index: 3, kind: input, shape index: {}]
  %s4 = inlined_call_operand.vmem [shape: f32[1,128], index: 4, kind: input, shape index: {}]
  %s5 = inlined_call_operand.hbm [shape: f32[2,16,16,128], index: 5, kind: output, shape index: {}]
  %s6 = sld [smem:[#allocation0]]
  $region69: #{tpu_custom_call.1} parent=0
    _
  %s8 = ssub.s32 1, %s6
  %s9 = scalar_select 0, %s8, %s6
  $region1: #{tpu_custom_call.1} parent=0
    #allocation2 [shape = 'u8[131072]{0}', space=vmem, size = 0x20000, scoped, tag = 'input window, operand 0']
    #allocation3 [shape = 's32[2]{0}', space=sflag, size = 0x8, scoped, tag = 'scoped memory for tpu_custom_call.1']
    #allocation4 [shape = 's32[2]{0}', space=sflag, size = 0x8, scoped, tag = 'scoped memory for tpu_custom_call.1']
    #allocation5 [shape = 'u8[16384]{0}', space=vmem, size = 0x4000, scoped, tag = 'input window, operand 1']
    #allocation6 [shape = 's32[2]{0}', space=sflag, size = 0x8, scoped, tag = 'scoped memory for tpu_custom_call.1']
    #allocation7 [shape = 'u8[16384]{0}', space=vmem, size = 0x4000, scoped, tag = 'input window, operand 2']
    #allocation8 [shape = 'u8[8192]{0}', space=vmem, size = 0x2000, scoped, tag = 'input window, operand 3, single buffered']
    #allocation9 [shape = 's32[1]{0}', space=sflag, size = 0x4, scoped, tag = 'scoped memory for tpu_custom_call.1']
    #allocation10 [shape = 'u8[131072]{0}', space=vmem, size = 0x20000, scoped, tag = 'output window, operand 0']
    %10 = vsyncpa [#allocation3], 0
    %s11 = scalar_lea.sflag [#allocation3], 1
    %12 = vsyncpa %s11, 0
    %13 = vsyncpa [#allocation6], 0
    %s14 = scalar_lea.sflag [#allocation6], 1
    %15 = vsyncpa %s14, 0
    %16 = vsyncpa [#allocation9], 0
    %17 = vsyncpa [#allocation4], 0
    %s18 = scalar_lea.sflag [#allocation4], 1
    %19 = vsyncpa %s18, 0
    loop: start=0, step=1, limit=6
    $region2: #{tpu_custom_call.1} parent=1 // loop_pre_header
      _
    $region3: #{tpu_custom_call.1} parent=1 // loop_header
      %s21 = sphi 0, %s25
      %p22 = scmp.ge.s32.totalorder %s21, 6
      %s28 = sphi 0, %s40
      %s29 = sphi 0, %s36
      %s30 = sphi 0, %s28
      %s31 = sphi 0, %s29
      %s32 = sphi 0, %s30
      %s33 = sphi 0, %s31
      %s45 = sphi 0, %s47
      %s48 = sphi 0, %s45
      %s49 = sphi 0, %s48
      %s65 = sphi 0, %s49
      %s81 = sphi 0, %s83
      %s84 = sphi 0, %s81
      %s85 = sphi 0, %s84
      %s101 = sphi 0, %s85
      %s117 = sphi 0, %s119
      %s120 = sphi 0, %s117
      %s121 = sphi 0, %s120
      %s137 = sphi 0, %s121
      %s141 = sphi 0, %s141
      %s143 = sphi 0, %s141
      %s144 = sphi 0, %s143
      %s158 = sphi 0, %s144
      %s162 = sphi 0, %s162
      %s164 = sphi 0, %s162
      %s165 = sphi 0, %s164
      %s179 = sphi 0, %s165
      %s187 = sphi 0, %s189
      %s190 = sphi 0, %s187
      %s191 = sphi 0, %s190
      %s207 = sphi 0, %s191
    $region4: #{tpu_custom_call.1} parent=1 // loop_header_branch
      %24 = sbr.rel (%p22) target = $region8
    $region5: #{tpu_custom_call.1} parent=1 // loop_body
      %s26 = ssub.s32 %s21, 1
      %s27 = ssub.s32 %s21, 2
      %s34 = sadd.s32 1, %s29
      %p35 = scmp.ge.s32.totalorder %s34, 2
      %s36 = scalar_select %p35, 0, %s34
      %s37 = sadd.s32 1, %s28
      %s38 = scalar_select %p35, %s37, %s28
      %p39 = scmp.ge.s32.totalorder %s38, 2
      %s40 = scalar_select %p39, 0, %s38
      %s41 = ssub.s32 %s28, %s40
      %s42 = ssub.s32 %s29, %s36
      %s43 = sor.u32 %s41, %s42
      %p44 = scmp.eq.s32.totalorder %s43, 0
      %s46 = sadd.s32 %s45, 1
      %s47 = scalar_select %p44, %s45, %s46
      %p50 = pneg %p44
      %p51 = scmp.eq.s32.totalorder %s21, 3
      %p52 = por %p50, %p51
      %p53 = scmp.ne.s32.totalorder %s45, %s48
      %p54 = scmp.eq.s32.totalorder %s21, 0
      %p55 = por %p53, %p54
      %p56 = scmp.ne.s32.totalorder %s45, %s48
      %p57 = scmp.eq.s32.totalorder %s26, 3
      %p58 = por %p56, %p57
      %p59 = scmp.ne.s32.totalorder %s48, %s49
      %p60 = scmp.eq.s32.totalorder %s26, 0
      %p61 = por %p59, %p60
      %p62 = scmp.ne.s32.totalorder %s48, %s49
      %p63 = scmp.eq.s32.totalorder %s27, 3
      %p64 = por %p62, %p63
      %p66 = scmp.ne.s32.totalorder %s49, %s65
      %p67 = scmp.eq.s32.totalorder %s27, 0
      %p68 = por %p66, %p67
      %s69 = smul.u32 %s29, 8
      %s70 = ssub.s32 %s69, 1
      %p71 = scmp.gt.s32.totalorder %s70, 0
      %s72 = scalar_select %p71, %s70, 0
      %s73 = smul.u32 %s36, 8
      %s74 = ssub.s32 %s73, 1
      %p75 = scmp.gt.s32.totalorder %s74, 0
      %s76 = scalar_select %p75, %s74, 0
      %s77 = ssub.s32 %s28, %s40
      %s78 = ssub.s32 %s72, %s76
      %s79 = sor.u32 %s77, %s78
      %p80 = scmp.eq.s32.totalorder %s79, 0
      %s82 = sadd.s32 %s81, 1
      %s83 = scalar_select %p80, %s81, %s82
      %p86 = pneg %p80
      %p87 = scmp.eq.s32.totalorder %s21, 3
      %p88 = por %p86, %p87
      %p89 = scmp.ne.s32.totalorder %s81, %s84
      %p90 = scmp.eq.s32.totalorder %s21, 0
      %p91 = por %p89, %p90
      %p92 = scmp.ne.s32.totalorder %s81, %s84
      %p93 = scmp.eq.s32.totalorder %s26, 3
      %p94 = por %p92, %p93
      %p95 = scmp.ne.s32.totalorder %s84, %s85
      %p96 = scmp.eq.s32.totalorder %s26, 0
      %p97 = por %p95, %p96
      %p98 = scmp.ne.s32.totalorder %s84, %s85
      %p99 = scmp.eq.s32.totalorder %s27, 3
      %p100 = por %p98, %p99
      %p102 = scmp.ne.s32.totalorder %s85, %s101
      %p103 = scmp.eq.s32.totalorder %s27, 0
      %p104 = por %p102, %p103
      %s105 = sadd.s32 %s29, 1
      %s106 = smul.u32 %s105, 8
      %p107 = scmp.lt.s32.totalorder %s106, 15
      %s108 = scalar_select %p107, %s106, 15
      %s109 = sadd.s32 %s36, 1
      %s110 = smul.u32 %s109, 8
      %p111 = scmp.lt.s32.totalorder %s110, 15
      %s112 = scalar_select %p111, %s110, 15
      %s113 = ssub.s32 %s28, %s40
      %s114 = ssub.s32 %s108, %s112
      %s115 = sor.u32 %s113, %s114
      %p116 = scmp.eq.s32.totalorder %s115, 0
      %s118 = sadd.s32 %s117, 1
      %s119 = scalar_select %p116, %s117, %s118
      %p122 = pneg %p116
      %p123 = scmp.eq.s32.totalorder %s21, 3
      %p124 = por %p122, %p123
      %p125 = scmp.ne.s32.totalorder %s117, %s120
      %p126 = scmp.eq.s32.totalorder %s21, 0
      %p127 = por %p125, %p126
      %p128 = scmp.ne.s32.totalorder %s117, %s120
      %p129 = scmp.eq.s32.totalorder %s26, 3
      %p130 = por %p128, %p129
      %p131 = scmp.ne.s32.totalorder %s120, %s121
      %p132 = scmp.eq.s32.totalorder %s26, 0
      %p133 = por %p131, %p132
      %p134 = scmp.ne.s32.totalorder %s120, %s121
      %p135 = scmp.eq.s32.totalorder %s27, 3
      %p136 = por %p134, %p135
      %p138 = scmp.ne.s32.totalorder %s121, %s137
      %p139 = scmp.eq.s32.totalorder %s27, 0
      %p140 = por %p138, %p139
      %s142 = sadd.s32 %s141, 1
      %p145 = scmp.eq.s32.totalorder %s21, 3
      %p146 = scmp.ne.s32.totalorder %s141, %s143
      %p147 = scmp.eq.s32.totalorder %s21, 0
      %p148 = por %p146, %p147
      %p149 = scmp.ne.s32.totalorder %s141, %s143
      %p150 = scmp.eq.s32.totalorder %s26, 3
      %p151 = por %p149, %p150
      %p152 = scmp.ne.s32.totalorder %s143, %s144
      %p153 = scmp.eq.s32.totalorder %s26, 0
      %p154 = por %p152, %p153
      %p155 = scmp.ne.s32.totalorder %s143, %s144
      %p156 = scmp.eq.s32.totalorder %s27, 3
      %p157 = por %p155, %p156
      %p159 = scmp.ne.s32.totalorder %s144, %s158
      %p160 = scmp.eq.s32.totalorder %s27, 0
      %p161 = por %p159, %p160
      %s163 = sadd.s32 %s162, 1
      %p166 = scmp.eq.s32.totalorder %s21, 3
      %p167 = scmp.ne.s32.totalorder %s162, %s164
      %p168 = scmp.eq.s32.totalorder %s21, 0
      %p169 = por %p167, %p168
      %p170 = scmp.ne.s32.totalorder %s162, %s164
      %p171 = scmp.eq.s32.totalorder %s26, 3
      %p172 = por %p170, %p171
      %p173 = scmp.ne.s32.totalorder %s164, %s165
      %p174 = scmp.eq.s32.totalorder %s26, 0
      %p175 = por %p173, %p174
      %p176 = scmp.ne.s32.totalorder %s164, %s165
      %p177 = scmp.eq.s32.totalorder %s27, 3
      %p178 = por %p176, %p177
      %p180 = scmp.ne.s32.totalorder %s165, %s179
      %p181 = scmp.eq.s32.totalorder %s27, 0
      %p182 = por %p180, %p181
      %s183 = ssub.s32 %s28, %s40
      %s184 = ssub.s32 %s29, %s36
      %s185 = sor.u32 %s183, %s184
      %p186 = scmp.eq.s32.totalorder %s185, 0
      %s188 = sadd.s32 %s187, 1
      %s189 = scalar_select %p186, %s187, %s188
      %p192 = pneg %p186
      %p193 = scmp.eq.s32.totalorder %s21, 3
      %p194 = por %p192, %p193
      %p195 = scmp.ne.s32.totalorder %s187, %s190
      %p196 = scmp.eq.s32.totalorder %s21, 0
      %p197 = por %p195, %p196
      %p198 = scmp.ne.s32.totalorder %s187, %s190
      %p199 = scmp.eq.s32.totalorder %s26, 3
      %p200 = por %p198, %p199
      %p201 = scmp.ne.s32.totalorder %s190, %s191
      %p202 = scmp.eq.s32.totalorder %s26, 0
      %p203 = por %p201, %p202
      %p204 = scmp.ne.s32.totalorder %s190, %s191
      %p205 = scmp.eq.s32.totalorder %s27, 3
      %p206 = por %p204, %p205
      %p208 = scmp.ne.s32.totalorder %s191, %s207
      %p209 = scmp.eq.s32.totalorder %s27, 0
      %p210 = por %p208, %p209
      %p211 = scmp.le.s32.totalorder 1, %s21
      %p212 = scmp.lt.s32.totalorder %s21, 5
      %p213 = pnand %p211, %p212
      %p214 = pneg %p213
      // Predicated region
      $region9: #{tpu_custom_call.1} parent=5 // pred_check
        _
      $region10: #{tpu_custom_call.1} parent=5 // pred_check_branch
        %216 = sbr.rel (%p213) target = $region12
      $region11: #{tpu_custom_call.1} parent=5 // pred_region
        %s217 = ssub.s32 %s21, 1
        // Predicated region
        $region13: #{tpu_custom_call.1} parent=11 // pred_check
          %p218 = pneg %p154
        $region14: #{tpu_custom_call.1} parent=11 // pred_check_branch
          %220 = sbr.rel (%p218) target = $region16
        $region15: #{tpu_custom_call.1} parent=11 // pred_region
          %s222 = ssub.s32 256, 256
          %223 = vsyncadd [#allocation9], %s222
          %s224 = sshll.u32 [#allocation8], 4
          %s225 = int_to_ptr.vmem [resolvable:$true] %s224
          %230 = dma.hbm_to_vmem [thread:$0]  %s3, 256, %s225, [#allocation9], 128, 128, 8
        $region16: #{tpu_custom_call.1} parent=11 // pred_fallthru
          _
        // Predicated region
        $region17: #{tpu_custom_call.1} parent=11 // pred_check
          %p231 = pneg %p175
        $region18: #{tpu_custom_call.1} parent=11 // pred_check_branch
          %233 = sbr.rel (%p231) target = $region20
        $region19: #{tpu_custom_call.1} parent=11 // pred_region
          _
        $region20: #{tpu_custom_call.1} parent=11 // pred_fallthru
          _
      $region12: #{tpu_custom_call.1} parent=5 // pred_fallthru
        _
      %p234 = scmp.lt.s32.totalorder %s21, 4
      // Predicated region
      $region21: #{tpu_custom_call.1} parent=5 // pred_check
        %p235 = pneg %p234
      $region22: #{tpu_custom_call.1} parent=5 // pred_check_branch
        %237 = sbr.rel (%p235) target = $region24
      $region23: #{tpu_custom_call.1} parent=5 // pred_region
        // Predicated region
        $region25: #{tpu_custom_call.1} parent=23 // pred_check
          %p238 = pneg %p55
        $region26: #{tpu_custom_call.1} parent=23 // pred_check_branch
          %240 = sbr.rel (%p238) target = $region28
        $region27: #{tpu_custom_call.1} parent=23 // pred_region
          %s241 = sand.u32 %s45, 1
          %s242 = scalar_lea.sflag [#allocation3], %s241
          %s243 = sand.u32 %s45, 1
          %s244 = smul.addr %s243, 128
          %s245 = scalar_lea.vmem [#allocation2], %s244
          %s246 = smul.u32 8, %s29
          %s248 = ssub.s32 2048, 2048
          %249 = vsyncadd %s242, %s248
          %s250 = smul.addr %s246, 2
          %s251 = smul.addr %s28, 32
          %s252 = sadd.s32 %s250, %s251
          %s253 = smul.addr %s252, 128
          %s254 = scalar_lea.hbm %s0, %s253
          %s255 = sshll.u32 %s245, 4
          %s256 = int_to_ptr.vmem [resolvable:$true] %s255
          %261 = dma.hbm_to_vmem [thread:$0]  %s254, 2048, %s256, %s242, 128, 128, 8
        $region28: #{tpu_custom_call.1} parent=23 // pred_fallthru
          _
        // Predicated region
        $region29: #{tpu_custom_call.1} parent=23 // pred_check
          %p262 = pneg %p91
        $region30: #{tpu_custom_call.1} parent=23 // pred_check_branch
          %264 = sbr.rel (%p262) target = $region32
        $region31: #{tpu_custom_call.1} parent=23 // pred_region
          %s265 = sand.u32 %s21, 1
          %s266 = scalar_lea.sflag [#allocation6], %s265
          %s267 = sand.u32 %s81, 1
          %s268 = smul.addr %s267, 16
          %s269 = scalar_lea.vmem [#allocation5], %s268
          %s270 = smul.u32 %s29, 8
          %s271 = ssub.s32 %s270, 1
          %p272 = scmp.gt.s32.totalorder %s271, 0
          %s273 = scalar_select %p272, %s271, 0
          %s275 = ssub.s32 256, 256
          %276 = vsyncadd %s266, %s275
          %s277 = smul.addr %s273, 2
          %s278 = smul.addr %s28, 32
          %s279 = sadd.s32 %s277, %s278
          %s280 = smul.addr %s279, 128
          %s281 = scalar_lea.hbm %s1, %s280
          %s282 = sshll.u32 %s269, 4
          %s283 = int_to_ptr.vmem [resolvable:$true] %s282
          %288 = dma.hbm_to_vmem [thread:$0]  %s281, 256, %s283, %s266, 128, 128, 8
        $region32: #{tpu_custom_call.1} parent=23 // pred_fallthru
          _
        // Predicated region
        $region33: #{tpu_custom_call.1} parent=23 // pred_check
          %p289 = pneg %p127
        $region34: #{tpu_custom_call.1} parent=23 // pred_check_branch
          %291 = sbr.rel (%p289) target = $region36
        $region35: #{tpu_custom_call.1} parent=23 // pred_region
          %s292 = sand.u32 %s21, 1
          %s293 = scalar_lea.sflag [#allocation6], %s292
          %s294 = sand.u32 %s117, 1
          %s295 = smul.addr %s294, 16
          %s296 = scalar_lea.vmem [#allocation7], %s295
          %s297 = sadd.s32 %s29, 1
          %s298 = smul.u32 %s297, 8
          %p299 = scmp.lt.s32.totalorder %s298, 15
          %s300 = scalar_select %p299, %s298, 15
          %s302 = ssub.s32 256, 256
          %303 = vsyncadd %s293, %s302
          %s304 = smul.addr %s300, 2
          %s305 = smul.addr %s28, 32
          %s306 = sadd.s32 %s304, %s305
          %s307 = smul.addr %s306, 128
          %s308 = scalar_lea.hbm %s2, %s307
          %s309 = sshll.u32 %s296, 4
          %s310 = int_to_ptr.vmem [resolvable:$true] %s309
          %315 = dma.hbm_to_vmem [thread:$0]  %s308, 256, %s310, %s293, 128, 128, 8
        $region36: #{tpu_custom_call.1} parent=23 // pred_fallthru
          _
      $region24: #{tpu_custom_call.1} parent=5 // pred_fallthru
        _
      %p316 = scmp.le.s32.totalorder 1, %s21
      %p317 = scmp.lt.s32.totalorder %s21, 5
      %p318 = pnand %p316, %p317
      %p319 = pneg %p318
      // Predicated region
      $region37: #{tpu_custom_call.1} parent=5 // pred_check
        _
      $region38: #{tpu_custom_call.1} parent=5 // pred_check_branch
        %321 = sbr.rel (%p318) target = $region40
      $region39: #{tpu_custom_call.1} parent=5 // pred_region
        %s322 = ssub.s32 %s21, 1
        %s323 = sand.u32 %s48, 1
        %s324 = scalar_lea.sflag [#allocation3], %s323
        %s325 = sand.u32 %s48, 1
        %s326 = smul.addr %s325, 128
        %s327 = scalar_lea.vmem [#allocation2], %s326
        // Predicated region
        $region41: #{tpu_custom_call.1} parent=39 // pred_check
          %p328 = pneg %p61
        $region42: #{tpu_custom_call.1} parent=39 // pred_check_branch
          %330 = sbr.rel (%p328) target = $region44
        $region43: #{tpu_custom_call.1} parent=39 // pred_region
          %331 = dma.done %s324, 2048
        $region44: #{tpu_custom_call.1} parent=39 // pred_fallthru
          _
        %s332 = sand.u32 %s26, 1
        %s333 = scalar_lea.sflag [#allocation6], %s332
        %s334 = sand.u32 %s84, 1
        %s335 = smul.addr %s334, 16
        %s336 = scalar_lea.vmem [#allocation5], %s335
        // Predicated region
        $region45: #{tpu_custom_call.1} parent=39 // pred_check
          %p337 = pneg %p97
        $region46: #{tpu_custom_call.1} parent=39 // pred_check_branch
          %339 = sbr.rel (%p337) target = $region48
        $region47: #{tpu_custom_call.1} parent=39 // pred_region
          %340 = dma.done %s333, 256
        $region48: #{tpu_custom_call.1} parent=39 // pred_fallthru
          _
        %s341 = sand.u32 %s26, 1
        %s342 = scalar_lea.sflag [#allocation6], %s341
        %s343 = sand.u32 %s120, 1
        %s344 = smul.addr %s343, 16
        %s345 = scalar_lea.vmem [#allocation7], %s344
        // Predicated region
        $region49: #{tpu_custom_call.1} parent=39 // pred_check
          %p346 = pneg %p133
        $region50: #{tpu_custom_call.1} parent=39 // pred_check_branch
          %348 = sbr.rel (%p346) target = $region52
        $region51: #{tpu_custom_call.1} parent=39 // pred_region
          %349 = dma.done %s342, 256
        $region52: #{tpu_custom_call.1} parent=39 // pred_fallthru
          _
        // Predicated region
        $region53: #{tpu_custom_call.1} parent=39 // pred_check
          %p350 = pneg %p154
        $region54: #{tpu_custom_call.1} parent=39 // pred_check_branch
          %352 = sbr.rel (%p350) target = $region56
        $region55: #{tpu_custom_call.1} parent=39 // pred_region
          %353 = dma.done [#allocation9], 256
        $region56: #{tpu_custom_call.1} parent=39 // pred_fallthru
          _
        %s354 = sand.u32 %s48, 1
        %s355 = scalar_lea.sflag [#allocation3], %s354
        %s356 = sand.u32 %s48, 1
        %s357 = smul.addr %s356, 128
        %s358 = scalar_lea.vmem [#allocation2], %s357
        %p359 = pneg %p61
        %p360 = pneg %p58
        %s361 = sand.u32 %s26, 1
        %s362 = scalar_lea.sflag [#allocation6], %s361
        %s363 = sand.u32 %s84, 1
        %s364 = smul.addr %s363, 16
        %s365 = scalar_lea.vmem [#allocation5], %s364
        %p366 = pneg %p97
        %p367 = pneg %p94
        %s368 = sand.u32 %s26, 1
        %s369 = scalar_lea.sflag [#allocation6], %s368
        %s370 = sand.u32 %s120, 1
        %s371 = smul.addr %s370, 16
        %s372 = scalar_lea.vmem [#allocation7], %s371
        %p373 = pneg %p133
        %p374 = pneg %p130
        %p375 = pneg %p154
        %p376 = pneg %p151
        %p377 = pneg %p175
        %p378 = pneg %p172
        %p379 = pneg %p203
        %p380 = pneg %p200
        %s381 = sand.u32 %s190, 1
        %s382 = scalar_lea.sflag [#allocation4], %s381
        %s383 = sand.u32 %s190, 1
        %s384 = smul.addr %s383, 128
        %s385 = scalar_lea.vmem [#allocation10], %s384
        %s386 = smul.u32 8, %s31
        %s387 = smul.u32 %s31, 8
        %s388 = ssub.s32 %s387, 1
        %p389 = scmp.gt.s32.totalorder %s388, 0
        %s390 = scalar_select %p389, %s388, 0
        %s391 = sadd.s32 %s31, 1
        %s392 = smul.u32 %s391, 8
        %p393 = scmp.lt.s32.totalorder %s392, 15
        %s394 = scalar_select %p393, %s392, 15
        %s395 = smul.u32 8, %s31
        %v396 = vld [vmem:[%s327] sm:$0xff]
        %v397 = vld [vmem:[%s327 + $0x8] sm:$0xff]
        %v398 = vld [vmem:[%s327 + $0x10] sm:$0xff]
        %v399 = vld [vmem:[%s327 + $0x18] sm:$0xff]
        %v400 = vld [vmem:[%s327 + $0x20] sm:$0xff]
        %v401 = vld [vmem:[%s327 + $0x28] sm:$0xff]
        %v402 = vld [vmem:[%s327 + $0x30] sm:$0xff]
        %v403 = vld [vmem:[%s327 + $0x38] sm:$0xff]
        %v404 = vld [vmem:[%s327 + $0x40] sm:$0xff]
        %v405 = vld [vmem:[%s327 + $0x48] sm:$0xff]
        %v406 = vld [vmem:[%s327 + $0x50] sm:$0xff]
        %v407 = vld [vmem:[%s327 + $0x58] sm:$0xff]
        %v408 = vld [vmem:[%s327 + $0x60] sm:$0xff]
        %v409 = vld [vmem:[%s327 + $0x68] sm:$0xff]
        %v410 = vld [vmem:[%s327 + $0x70] sm:$0xff]
        %v411 = vld [vmem:[%s327 + $0x78] sm:$0xff]
        %v412 = vld [vmem:[%s336] sm:$0xff]
        %v413 = vld [vmem:[%s336 + $0x8] sm:$0xff]
        %v414 = vld [vmem:[%s345] sm:$0xff]
        %v415 = vld [vmem:[%s345 + $0x8] sm:$0xff]
        %p416 = scmp.eq.s32.totalorder %s31, 0
        %s417 = scalar_select %p416, 1, 0
        %v418 = vstv %s417
        %vm419 = vcmp.eq.s32.totalorder %v418, 1
        %v420 = vsel %vm419, 0.0, %v412
        %v421 = vsel %vm419, 0.0, %v413
        %p422 = scmp.eq.s32.totalorder %s31, 1
        %s423 = scalar_select %p422, 1, 0
        %v424 = vstv %s423
        %vm425 = vcmp.eq.s32.totalorder %v424, 1
        %v426 = vsel %vm425, 0.0, %v414
        %v427 = vsel %vm425, 0.0, %v415
        %v428 = vld [vmem:[#allocation8] sm:$0xff]
        %v429 = vld [vmem:[#allocation8 + $0x8] sm:$0x1]
        %v430 = vlaneseq
        %v431 = vshrl.u32 %v430, 7
        %v432 = vsub.s32 1, %v431
        %v433 = vrot.slane %v428, %v432
        %v434 = vmul.f32 %v420, %v433
        %v435 = vmul.f32 %v421, %v433
        %v436 = vmul.f32 %v396, %v433
        %v437 = vmul.f32 %v397, %v433
        %v438 = vmul.f32 %v398, %v433
        %v439 = vmul.f32 %v399, %v433
        %v440 = vmul.f32 %v400, %v433
        %v441 = vmul.f32 %v401, %v433
        %v442 = vmul.f32 %v402, %v433
        %v443 = vmul.f32 %v403, %v433
        %v444 = vmul.f32 %v404, %v433
        %v445 = vmul.f32 %v405, %v433
        %v446 = vmul.f32 %v406, %v433
        %v447 = vmul.f32 %v407, %v433
        %v448 = vmul.f32 %v408, %v433
        %v449 = vmul.f32 %v409, %v433
        %v450 = vlaneseq
        %v451 = vshrl.u32 %v450, 7
        %v452 = vsub.s32 4, %v451
        %v453 = vrot.slane %v428, %v452
        %v454 = vmul.f32 %v396, %v453
        %v455 = vmul.f32 %v397, %v453
        %v456 = vmul.f32 %v398, %v453
        %v457 = vmul.f32 %v399, %v453
        %v458 = vmul.f32 %v400, %v453
        %v459 = vmul.f32 %v401, %v453
        %v460 = vmul.f32 %v402, %v453
        %v461 = vmul.f32 %v403, %v453
        %v462 = vmul.f32 %v404, %v453
        %v463 = vmul.f32 %v405, %v453
        %v464 = vmul.f32 %v406, %v453
        %v465 = vmul.f32 %v407, %v453
        %v466 = vmul.f32 %v408, %v453
        %v467 = vmul.f32 %v409, %v453
        %v468 = vmul.f32 %v410, %v453
        %v469 = vmul.f32 %v411, %v453
        %v470 = vadd.f32 %v434, %v454
        %v471 = vadd.f32 %v435, %v455
        %v472 = vadd.f32 %v436, %v456
        %v473 = vadd.f32 %v437, %v457
        %v474 = vadd.f32 %v438, %v458
        %v475 = vadd.f32 %v439, %v459
        %v476 = vadd.f32 %v440, %v460
        %v477 = vadd.f32 %v441, %v461
        %v478 = vadd.f32 %v442, %v462
        %v479 = vadd.f32 %v443, %v463
        %v480 = vadd.f32 %v444, %v464
        %v481 = vadd.f32 %v445, %v465
        %v482 = vadd.f32 %v446, %v466
        %v483 = vadd.f32 %v447, %v467
        %v484 = vadd.f32 %v448, %v468
        %v485 = vadd.f32 %v449, %v469
        %v486 = vlaneseq
        %v487 = vshrl.u32 %v486, 7
        %v488 = vsub.s32 7, %v487
        %v489 = vrot.slane %v428, %v488
        %v490 = vmul.f32 %v398, %v489
        %v491 = vmul.f32 %v399, %v489
        %v492 = vmul.f32 %v400, %v489
        %v493 = vmul.f32 %v401, %v489
        %v494 = vmul.f32 %v402, %v489
        %v495 = vmul.f32 %v403, %v489
        %v496 = vmul.f32 %v404, %v489
        %v497 = vmul.f32 %v405, %v489
        %v498 = vmul.f32 %v406, %v489
        %v499 = vmul.f32 %v407, %v489
        %v500 = vmul.f32 %v408, %v489
        %v501 = vmul.f32 %v409, %v489
        %v502 = vmul.f32 %v410, %v489
        %v503 = vmul.f32 %v411, %v489
        %v504 = vmul.f32 %v426, %v489
        %v505 = vmul.f32 %v427, %v489
        %v506 = vadd.f32 %v470, %v490
        %v507 = vadd.f32 %v471, %v491
        %v508 = vadd.f32 %v472, %v492
        %v509 = vadd.f32 %v473, %v493
        %v510 = vadd.f32 %v474, %v494
        %v511 = vadd.f32 %v475, %v495
        %v512 = vadd.f32 %v476, %v496
        %v513 = vadd.f32 %v477, %v497
        %v514 = vadd.f32 %v478, %v498
        %v515 = vadd.f32 %v479, %v499
        %v516 = vadd.f32 %v480, %v500
        %v517 = vadd.f32 %v481, %v501
        %v518 = vadd.f32 %v482, %v502
        %v519 = vadd.f32 %v483, %v503
        %v520 = vadd.f32 %v484, %v504
        %v521 = vadd.f32 %v485, %v505
        %v522 = vld [vmem:[%s4] sm:$0x1]
        %v524 = vlaneseq
        %v525 = vshrl.u32 %v524, 7
        %v526 = vsub.s32 0, %v525
        %v527 = vrot.slane %v522, %v526
        %v529 = vadd.f32 %v506, %v527
        %v530 = vadd.f32 %v507, %v527
        %v531 = vadd.f32 %v508, %v527
        %v532 = vadd.f32 %v509, %v527
        %v533 = vadd.f32 %v510, %v527
        %v534 = vadd.f32 %v511, %v527
        %v535 = vadd.f32 %v512, %v527
        %v536 = vadd.f32 %v513, %v527
        %v537 = vadd.f32 %v514, %v527
        %v538 = vadd.f32 %v515, %v527
        %v539 = vadd.f32 %v516, %v527
        %v540 = vadd.f32 %v517, %v527
        %v541 = vadd.f32 %v518, %v527
        %v542 = vadd.f32 %v519, %v527
        %v543 = vadd.f32 %v520, %v527
        %v544 = vadd.f32 %v521, %v527
        %v545 = vlaneseq
        %v546 = vshrl.u32 %v545, 7
        %v547 = vsub.s32 0, %v546
        %v548 = vrot.slane %v428, %v547
        %v549 = vmul.f32 %v420, %v548
        %v550 = vmul.f32 %v421, %v548
        %v551 = vmul.f32 %v396, %v548
        %v552 = vmul.f32 %v397, %v548
        %v553 = vmul.f32 %v398, %v548
        %v554 = vmul.f32 %v399, %v548
        %v555 = vmul.f32 %v400, %v548
        %v556 = vmul.f32 %v401, %v548
        %v557 = vmul.f32 %v402, %v548
        %v558 = vmul.f32 %v403, %v548
        %v559 = vmul.f32 %v404, %v548
        %v560 = vmul.f32 %v405, %v548
        %v561 = vmul.f32 %v406, %v548
        %v562 = vmul.f32 %v407, %v548
        %v563 = vmul.f32 %v408, %v548
        %v564 = vmul.f32 %v409, %v548
        %v565 = vlaneseq
        %v566 = vshrl.u32 %v565, 7
        %v567 = vsub.s32 3, %v566
        %v568 = vrot.slane %v428, %v567
        %v569 = vmul.f32 %v396, %v568
        %v570 = vmul.f32 %v397, %v568
        %v571 = vmul.f32 %v398, %v568
        %v572 = vmul.f32 %v399, %v568
        %v573 = vmul.f32 %v400, %v568
        %v574 = vmul.f32 %v401, %v568
        %v575 = vmul.f32 %v402, %v568
        %v576 = vmul.f32 %v403, %v568
        %v577 = vmul.f32 %v404, %v568
        %v578 = vmul.f32 %v405, %v568
        %v579 = vmul.f32 %v406, %v568
        %v580 = vmul.f32 %v407, %v568
        %v581 = vmul.f32 %v408, %v568
        %v582 = vmul.f32 %v409, %v568
        %v583 = vmul.f32 %v410, %v568
        %v584 = vmul.f32 %v411, %v568
        %v585 = vadd.f32 %v549, %v569
        %v586 = vadd.f32 %v550, %v570
        %v587 = vadd.f32 %v551, %v571
        %v588 = vadd.f32 %v552, %v572
        %v589 = vadd.f32 %v553, %v573
        %v590 = vadd.f32 %v554, %v574
        %v591 = vadd.f32 %v555, %v575
        %v592 = vadd.f32 %v556, %v576
        %v593 = vadd.f32 %v557, %v577
        %v594 = vadd.f32 %v558, %v578
        %v595 = vadd.f32 %v559, %v579
        %v596 = vadd.f32 %v560, %v580
        %v597 = vadd.f32 %v561, %v581
        %v598 = vadd.f32 %v562, %v582
        %v599 = vadd.f32 %v563, %v583
        %v600 = vadd.f32 %v564, %v584
        %v601 = vlaneseq
        %v602 = vshrl.u32 %v601, 7
        %v603 = vsub.s32 6, %v602
        %v604 = vrot.slane %v428, %v603
        %v605 = vmul.f32 %v398, %v604
        %v606 = vmul.f32 %v399, %v604
        %v607 = vmul.f32 %v400, %v604
        %v608 = vmul.f32 %v401, %v604
        %v609 = vmul.f32 %v402, %v604
        %v610 = vmul.f32 %v403, %v604
        %v611 = vmul.f32 %v404, %v604
        %v612 = vmul.f32 %v405, %v604
        %v613 = vmul.f32 %v406, %v604
        %v614 = vmul.f32 %v407, %v604
        %v615 = vmul.f32 %v408, %v604
        %v616 = vmul.f32 %v409, %v604
        %v617 = vmul.f32 %v410, %v604
        %v618 = vmul.f32 %v411, %v604
        %v619 = vmul.f32 %v426, %v604
        %v620 = vmul.f32 %v427, %v604
        %v621 = vadd.f32 %v585, %v605
        %v622 = vadd.f32 %v586, %v606
        %v623 = vadd.f32 %v587, %v607
        %v624 = vadd.f32 %v588, %v608
        %v625 = vadd.f32 %v589, %v609
        %v626 = vadd.f32 %v590, %v610
        %v627 = vadd.f32 %v591, %v611
        %v628 = vadd.f32 %v592, %v612
        %v629 = vadd.f32 %v593, %v613
        %v630 = vadd.f32 %v594, %v614
        %v631 = vadd.f32 %v595, %v615
        %v632 = vadd.f32 %v596, %v616
        %v633 = vadd.f32 %v597, %v617
        %v634 = vadd.f32 %v598, %v618
        %v635 = vadd.f32 %v599, %v619
        %v636 = vadd.f32 %v600, %v620
        %vm653 = vcmask 1040384
        %v654 = vrot.slane %v621, 7
        %v655 = vrot.slane %v622, 7
        %v656 = vsel %vm653, %v654, %v655
        %v657 = vrot.slane %v623, 7
        %v658 = vrot.slane %v624, 7
        %v659 = vsel %vm653, %v657, %v658
        %v660 = vrot.slane %v625, 7
        %v661 = vrot.slane %v626, 7
        %v662 = vsel %vm653, %v660, %v661
        %v663 = vrot.slane %v627, 7
        %v664 = vrot.slane %v628, 7
        %v665 = vsel %vm653, %v663, %v664
        %v666 = vrot.slane %v629, 7
        %v667 = vrot.slane %v630, 7
        %v668 = vsel %vm653, %v666, %v667
        %v669 = vrot.slane %v631, 7
        %v670 = vrot.slane %v632, 7
        %v671 = vsel %vm653, %v669, %v670
        %v672 = vrot.slane %v633, 7
        %v673 = vrot.slane %v634, 7
        %v674 = vsel %vm653, %v672, %v673
        %v675 = vrot.slane %v635, 7
        %v676 = vrot.slane %v636, 7
        %v677 = vsel %vm653, %v675, %v676
        %v694 = vsel %vm653, 0.0, %v654
        %v695 = vsel %vm653, 0.0, %v657
        %v696 = vsel %vm653, 0.0, %v660
        %v697 = vsel %vm653, 0.0, %v663
        %v698 = vsel %vm653, 0.0, %v666
        %v699 = vsel %vm653, 0.0, %v669
        %v700 = vsel %vm653, 0.0, %v672
        %v701 = vsel %vm653, 0.0, %v675
        %v702 = vadd.f32 %v529, %v694
        %v703 = vadd.f32 %v530, %v656
        %v704 = vadd.f32 %v531, %v695
        %v705 = vadd.f32 %v532, %v659
        %v706 = vadd.f32 %v533, %v696
        %v707 = vadd.f32 %v534, %v662
        %v708 = vadd.f32 %v535, %v697
        %v709 = vadd.f32 %v536, %v665
        %v710 = vadd.f32 %v537, %v698
        %v711 = vadd.f32 %v538, %v668
        %v712 = vadd.f32 %v539, %v699
        %v713 = vadd.f32 %v540, %v671
        %v714 = vadd.f32 %v541, %v700
        %v715 = vadd.f32 %v542, %v674
        %v716 = vadd.f32 %v543, %v701
        %v717 = vadd.f32 %v544, %v677
        %v718 = vlaneseq
        %v719 = vshrl.u32 %v718, 7
        %v720 = vsub.s32 2, %v719
        %v721 = vrot.slane %v428, %v720
        %v722 = vmul.f32 %v420, %v721
        %v723 = vmul.f32 %v421, %v721
        %v724 = vmul.f32 %v396, %v721
        %v725 = vmul.f32 %v397, %v721
        %v726 = vmul.f32 %v398, %v721
        %v727 = vmul.f32 %v399, %v721
        %v728 = vmul.f32 %v400, %v721
        %v729 = vmul.f32 %v401, %v721
        %v730 = vmul.f32 %v402, %v721
        %v731 = vmul.f32 %v403, %v721
        %v732 = vmul.f32 %v404, %v721
        %v733 = vmul.f32 %v405, %v721
        %v734 = vmul.f32 %v406, %v721
        %v735 = vmul.f32 %v407, %v721
        %v736 = vmul.f32 %v408, %v721
        %v737 = vmul.f32 %v409, %v721
        %v738 = vlaneseq
        %v739 = vshrl.u32 %v738, 7
        %v740 = vsub.s32 5, %v739
        %v741 = vrot.slane %v428, %v740
        %v742 = vmul.f32 %v396, %v741
        %v743 = vmul.f32 %v397, %v741
        %v744 = vmul.f32 %v398, %v741
        %v745 = vmul.f32 %v399, %v741
        %v746 = vmul.f32 %v400, %v741
        %v747 = vmul.f32 %v401, %v741
        %v748 = vmul.f32 %v402, %v741
        %v749 = vmul.f32 %v403, %v741
        %v750 = vmul.f32 %v404, %v741
        %v751 = vmul.f32 %v405, %v741
        %v752 = vmul.f32 %v406, %v741
        %v753 = vmul.f32 %v407, %v741
        %v754 = vmul.f32 %v408, %v741
        %v755 = vmul.f32 %v409, %v741
        %v756 = vmul.f32 %v410, %v741
        %v757 = vmul.f32 %v411, %v741
        %v758 = vadd.f32 %v722, %v742
        %v759 = vadd.f32 %v723, %v743
        %v760 = vadd.f32 %v724, %v744
        %v761 = vadd.f32 %v725, %v745
        %v762 = vadd.f32 %v726, %v746
        %v763 = vadd.f32 %v727, %v747
        %v764 = vadd.f32 %v728, %v748
        %v765 = vadd.f32 %v729, %v749
        %v766 = vadd.f32 %v730, %v750
        %v767 = vadd.f32 %v731, %v751
        %v768 = vadd.f32 %v732, %v752
        %v769 = vadd.f32 %v733, %v753
        %v770 = vadd.f32 %v734, %v754
        %v771 = vadd.f32 %v735, %v755
        %v772 = vadd.f32 %v736, %v756
        %v773 = vadd.f32 %v737, %v757
        %v774 = vlaneseq
        %v775 = vshrl.u32 %v774, 7
        %v776 = vsub.s32 0, %v775
        %v777 = vrot.slane %v429, %v776
        %v778 = vmul.f32 %v398, %v777
        %v779 = vmul.f32 %v399, %v777
        %v780 = vmul.f32 %v400, %v777
        %v781 = vmul.f32 %v401, %v777
        %v782 = vmul.f32 %v402, %v777
        %v783 = vmul.f32 %v403, %v777
        %v784 = vmul.f32 %v404, %v777
        %v785 = vmul.f32 %v405, %v777
        %v786 = vmul.f32 %v406, %v777
        %v787 = vmul.f32 %v407, %v777
        %v788 = vmul.f32 %v408, %v777
        %v789 = vmul.f32 %v409, %v777
        %v790 = vmul.f32 %v410, %v777
        %v791 = vmul.f32 %v411, %v777
        %v792 = vmul.f32 %v426, %v777
        %v793 = vmul.f32 %v427, %v777
        %v794 = vadd.f32 %v758, %v778
        %v795 = vadd.f32 %v759, %v779
        %v796 = vadd.f32 %v760, %v780
        %v797 = vadd.f32 %v761, %v781
        %v798 = vadd.f32 %v762, %v782
        %v799 = vadd.f32 %v763, %v783
        %v800 = vadd.f32 %v764, %v784
        %v801 = vadd.f32 %v765, %v785
        %v802 = vadd.f32 %v766, %v786
        %v803 = vadd.f32 %v767, %v787
        %v804 = vadd.f32 %v768, %v788
        %v805 = vadd.f32 %v769, %v789
        %v806 = vadd.f32 %v770, %v790
        %v807 = vadd.f32 %v771, %v791
        %v808 = vadd.f32 %v772, %v792
        %v809 = vadd.f32 %v773, %v793
        %vm826 = vcmask 1046528
        %v827 = vrot.slane %v794, 1
        %v828 = vrot.slane %v795, 1
        %v829 = vsel %vm826, %v827, %v828
        %v830 = vrot.slane %v796, 1
        %v831 = vrot.slane %v797, 1
        %v832 = vsel %vm826, %v830, %v831
        %v833 = vrot.slane %v798, 1
        %v834 = vrot.slane %v799, 1
        %v835 = vsel %vm826, %v833, %v834
        %v836 = vrot.slane %v800, 1
        %v837 = vrot.slane %v801, 1
        %v838 = vsel %vm826, %v836, %v837
        %v839 = vrot.slane %v802, 1
        %v840 = vrot.slane %v803, 1
        %v841 = vsel %vm826, %v839, %v840
        %v842 = vrot.slane %v804, 1
        %v843 = vrot.slane %v805, 1
        %v844 = vsel %vm826, %v842, %v843
        %v845 = vrot.slane %v806, 1
        %v846 = vrot.slane %v807, 1
        %v847 = vsel %vm826, %v845, %v846
        %v848 = vrot.slane %v808, 1
        %v849 = vrot.slane %v809, 1
        %v850 = vsel %vm826, %v848, %v849
        %v867 = vsel %vm826, %v828, 0.0
        %v868 = vsel %vm826, %v831, 0.0
        %v869 = vsel %vm826, %v834, 0.0
        %v870 = vsel %vm826, %v837, 0.0
        %v871 = vsel %vm826, %v840, 0.0
        %v872 = vsel %vm826, %v843, 0.0
        %v873 = vsel %vm826, %v846, 0.0
        %v874 = vsel %vm826, %v849, 0.0
        %v875 = vadd.f32 %v702, %v829
        %v876 = vadd.f32 %v703, %v867
        %v877 = vadd.f32 %v704, %v832
        %v878 = vadd.f32 %v705, %v868
        %v879 = vadd.f32 %v706, %v835
        %v880 = vadd.f32 %v707, %v869
        %v881 = vadd.f32 %v708, %v838
        %v882 = vadd.f32 %v709, %v870
        %v883 = vadd.f32 %v710, %v841
        %v884 = vadd.f32 %v711, %v871
        %v885 = vadd.f32 %v712, %v844
        %v886 = vadd.f32 %v713, %v872
        %v887 = vadd.f32 %v714, %v847
        %v888 = vadd.f32 %v715, %v873
        %v889 = vadd.f32 %v716, %v850
        %v890 = vadd.f32 %v717, %v874
        %891 = vst [vmem:[%s385] sm:$0xff] %v875
        %892 = vst [vmem:[%s385 + $0x8] sm:$0xff] %v876
        %893 = vst [vmem:[%s385 + $0x10] sm:$0xff] %v877
        %894 = vst [vmem:[%s385 + $0x18] sm:$0xff] %v878
        %895 = vst [vmem:[%s385 + $0x20] sm:$0xff] %v879
        %896 = vst [vmem:[%s385 + $0x28] sm:$0xff] %v880
        %897 = vst [vmem:[%s385 + $0x30] sm:$0xff] %v881
        %898 = vst [vmem:[%s385 + $0x38] sm:$0xff] %v882
        %899 = vst [vmem:[%s385 + $0x40] sm:$0xff] %v883
        %900 = vst [vmem:[%s385 + $0x48] sm:$0xff] %v884
        %901 = vst [vmem:[%s385 + $0x50] sm:$0xff] %v885
        %902 = vst [vmem:[%s385 + $0x58] sm:$0xff] %v886
        %903 = vst [vmem:[%s385 + $0x60] sm:$0xff] %v887
        %904 = vst [vmem:[%s385 + $0x68] sm:$0xff] %v888
        %905 = vst [vmem:[%s385 + $0x70] sm:$0xff] %v889
        %906 = vst [vmem:[%s385 + $0x78] sm:$0xff] %v890
        %s907 = sand.u32 %s190, 1
        %s908 = scalar_lea.sflag [#allocation4], %s907
        %s909 = sand.u32 %s190, 1
        %s910 = smul.addr %s909, 128
        %s911 = scalar_lea.vmem [#allocation10], %s910
        // Predicated region
        $region57: #{tpu_custom_call.1} parent=39 // pred_check
          %p912 = pneg %p200
        $region58: #{tpu_custom_call.1} parent=39 // pred_check_branch
          %914 = sbr.rel (%p912) target = $region60
        $region59: #{tpu_custom_call.1} parent=39 // pred_region
          %s915 = smul.u32 8, %s31
          %s917 = ssub.s32 2048, 2048
          %918 = vsyncadd %s908, %s917
          %s919 = smul.addr %s915, 2
          %s920 = smul.addr %s30, 32
          %s921 = sadd.s32 %s919, %s920
          %s922 = smul.addr %s921, 128
          %s923 = scalar_lea.hbm %s5, %s922
          %s924 = sshll.u32 %s911, 4
          %s925 = int_to_ptr.vmem [resolvable:$true] %s924
          %930 = dma.vmem_to_hbm [thread:$0]  %s925, 2048, %s923, %s908, 128, 128, 8
        $region60: #{tpu_custom_call.1} parent=39 // pred_fallthru
          _
      $region40: #{tpu_custom_call.1} parent=5 // pred_fallthru
        _
      %p931 = scmp.le.s32.totalorder 2, %s21
      // Predicated region
      $region61: #{tpu_custom_call.1} parent=5 // pred_check
        %p932 = pneg %p931
      $region62: #{tpu_custom_call.1} parent=5 // pred_check_branch
        %934 = sbr.rel (%p932) target = $region64
      $region63: #{tpu_custom_call.1} parent=5 // pred_region
        %s935 = ssub.s32 %s21, 2
        // Predicated region
        $region65: #{tpu_custom_call.1} parent=63 // pred_check
          %p936 = pneg %p206
        $region66: #{tpu_custom_call.1} parent=63 // pred_check_branch
          %938 = sbr.rel (%p936) target = $region68
        $region67: #{tpu_custom_call.1} parent=63 // pred_region
          %s939 = sand.u32 %s191, 1
          %s940 = scalar_lea.sflag [#allocation4], %s939
          %s941 = sand.u32 %s191, 1
          %s942 = smul.addr %s941, 128
          %s943 = scalar_lea.vmem [#allocation10], %s942
          %944 = dma.done %s940, 2048
        $region68: #{tpu_custom_call.1} parent=63 // pred_fallthru
          _
      $region64: #{tpu_custom_call.1} parent=5 // pred_fallthru
        _
    $region6: #{tpu_custom_call.1} parent=1 // loop_footer
      %s25 = sadd.s32 1, %s21
    $region7: #{tpu_custom_call.1} parent=1 // loop_footer_branch
      %20 = sbr.rel target = $region3
    $region8: #{tpu_custom_call.1} parent=1 // loop_exit
      _
    %945 = vsyncpa [#allocation3], 1
    %s946 = scalar_lea.sflag [#allocation3], 1
    %947 = vsyncpa %s946, 1
    %948 = vsyncpa [#allocation6], 1
    %s949 = scalar_lea.sflag [#allocation6], 1
    %950 = vsyncpa %s949, 1
    %951 = vsyncpa [#allocation9], 1
    %952 = vsyncpa [#allocation4], 1
    %s953 = scalar_lea.sflag [#allocation4], 1
    %954 = vsyncpa %s953, 1

</llo_original>
